<compile_context>
chip_gen: v7x
topology: tpu7x:2x2x1
jax: 0.10.0
libtpu: 0.0.40
codegen_flags: <defaults>
</compile_context>

<pallas_src>
import jax
import jax.numpy as jnp
from jax.experimental import pallas as pl
from jax.experimental.pallas import tpu as pltpu

LANE = 128  # lane width; layer-4 output is zero-padded to this so h4 is lane-dense


def _round_up(x, m):
    return ((x + m - 1) // m) * m


def _mlp_kernel(x_ref,
                w1_ref, b1_ref,
                w2_ref, b2_ref,
                w3_ref, b3_ref,
                w4_ref, b4_ref,
                w5_ref, b5_ref,
                o_ref):
    """Fused 5-layer MLP for one (tile_m, D_in) batch tile."""
    h = x_ref[...]
    if h.dtype != jnp.bfloat16:            # cast only if the caller sent f32
        h = h.astype(jnp.bfloat16)

    # Linear(D_in -> 512) + ReLU   (bf16 x bf16 -> f32 acc; bias/ReLU in f32)
    a = jnp.dot(h, w1_ref[...], preferred_element_type=jnp.float32) + b1_ref[...]
    h = jnp.maximum(a, 0.0).astype(jnp.bfloat16)
    # Linear(512 -> 256) + ReLU
    a = jnp.dot(h, w2_ref[...], preferred_element_type=jnp.float32) + b2_ref[...]
    h = jnp.maximum(a, 0.0).astype(jnp.bfloat16)
    # Linear(256 -> 128) + ReLU
    a = jnp.dot(h, w3_ref[...], preferred_element_type=jnp.float32) + b3_ref[...]
    h = jnp.maximum(a, 0.0).astype(jnp.bfloat16)
    # Linear(128 -> 32) + ReLU, width zero-padded to 128 lanes (padded cols stay 0)
    a = jnp.dot(h, w4_ref[...], preferred_element_type=jnp.float32) + b4_ref[...]
    h = jnp.maximum(a, 0.0).astype(jnp.bfloat16)
    # Output layer: Linear(32 -> 16); the zero-padded K rows contribute nothing.
    code = jnp.dot(h, w5_ref[...], preferred_element_type=jnp.float32) + b5_ref[...]

    o_ref[...] = code.astype(o_ref.dtype)


def _pick_tiling(B, tile_m, sublane):
    """Return (tile_m, B_pad, n_tiles)."""
    if B <= tile_m:
        # Small batch: single tile rounded only to sublane granularity.
        t = _round_up(max(B, 1), sublane)
        return t, t, 1
    # Large batch: tile_m rows per grid step, multiple of 128.
    t = _round_up(min(tile_m, B), 128)
    n = pl.cdiv(B, t)
    if n % 2 == 1:
        # v7x shards the "parallel" axis across 2 TensorCores; avoid an odd
        # tile count that would leave one core idle/imbalanced.
        t = _round_up(pl.cdiv(B, n + 1), 128)
        n = pl.cdiv(B, t)
    return t, n * t, n


def linear_encoder_forward(x, params, tile_m=1024):
    """x: [B, D_in] (f32 or bf16). params: list of (W_T [D_in, D_out], b [1, D_out])."""
    B, D_in = x.shape
    n_layers = len(params)
    out_dim = params[-1][1].shape[-1]          # true code dimension (16)
    sublane = 16 if x.dtype == jnp.bfloat16 else 8

    tile_m, B_pad, n_tiles = _pick_tiling(B, tile_m, sublane)
    if B_pad != B:
        x = jnp.pad(x, ((0, B_pad - B), (0, 0)))

    flat_args = [x]
    in_specs = [pl.BlockSpec((tile_m, D_in), lambda i: (i, 0))]

    def _resident_spec(shape):
        # Constant index_map + single buffer: DMA'd once, stays VMEM-resident.
        return pl.BlockSpec(shape, lambda i: (0, 0), pipeline_mode=pl.Buffered(1))

    for li, (w, b) in enumerate(params):
        w = w.astype(jnp.bfloat16)     # halves weight DMA; bf16-native MXU path
        b = b.astype(jnp.float32)      # bias-add / ReLU stay f32 on the VPU
        if li == n_layers - 2:
            # Pad penultimate output width 32 -> 128 with zero cols/bias so the
            # last activation is lane-dense.
            pad = LANE - w.shape[1]
            if pad > 0:
                w = jnp.pad(w, ((0, 0), (0, pad)))
                b = jnp.pad(b, ((0, 0), (0, pad)))
        elif li == n_layers - 1:
            # Matching zero K-rows for the final layer (32 -> 128).
            pad = LANE - w.shape[0]
            if pad > 0:
                w = jnp.pad(w, ((0, pad), (0, 0)))
        flat_args += [w, b]
        in_specs.append(_resident_spec(w.shape))
        in_specs.append(_resident_spec(b.shape))

    out = pl.pallas_call(
        _mlp_kernel,
        grid=(n_tiles,),
        in_specs=in_specs,
        # True 16-wide code output: no padded writeback.
        out_specs=pl.BlockSpec((tile_m, out_dim), lambda i: (i, 0)),
        out_shape=jax.ShapeDtypeStruct((B_pad, out_dim), jnp.float32),
        compiler_params=pltpu.CompilerParams(
            dimension_semantics=("parallel",),
        ),
    )(*flat_args)

    return out[:B] if B_pad != B else out


def init_params(key, input_shape):
    """Deterministic init mimicking nn.Linear default U(-1/sqrt(fan_in), +)."""
    dims = [input_shape, 512, 256, 128, 32, 16]
    params = []
    for i in range(len(dims) - 1):
        fan_in, fan_out = dims[i], dims[i + 1]
        key, kw, kb = jax.random.split(key, 3)
        bound = 1.0 / (fan_in ** 0.5)
        # Stored directly as [fan_in, fan_out] (i.e. W.T relative to PyTorch).
        w_t = jax.random.uniform(kw, (fan_in, fan_out), jnp.float32, -bound, bound)
        b = jax.random.uniform(kb, (1, fan_out), jnp.float32, -bound, bound)
        params.append((w_t, b))
    return params


def reference_forward(x, params):
    """Pure-JAX reference mirroring the kernel's bf16-input / f32-accumulate math."""
    h = x.astype(jnp.float32)
    n = len(params)
    for i, (w, b) in enumerate(params):
        h = jnp.dot(h.astype(jnp.bfloat16), w.astype(jnp.bfloat16),
                    preferred_element_type=jnp.float32) + b
        if i < n - 1:
            h = jnp.maximum(h, 0.0)
    return h


if __name__ == "__main__":
    key = jax.random.PRNGKey(0)
    key, kx = jax.random.split(key)

    batch = 2
    input_shape = 64  # kwargs['input_shape']

    x = jax.random.normal(kx, (batch, input_shape), jnp.float32)
    params = init_params(key, input_shape)

    code = linear_encoder_forward(x, params)
    code = jax.block_until_ready(code)

    ref = reference_forward(x, params)
    assert code.shape == (batch, 16), code.shape
    assert jnp.allclose(code, ref, atol=2e-2, rtol=2e-2), "mismatch vs reference"

    print("KERNEL_OK")
</pallas_src>

<mosaic_0001>
module attributes {stable_mosaic.version = 11 : i64} {
  func.func @_mlp_kernel(%arg0: i32, %arg1: memref<8x64xf32, #tpu.memory_space<vmem>>, %arg2: memref<64x512xbf16, #tpu.memory_space<vmem>>, %arg3: memref<1x512xf32, #tpu.memory_space<vmem>>, %arg4: memref<512x256xbf16, #tpu.memory_space<vmem>>, %arg5: memref<1x256xf32, #tpu.memory_space<vmem>>, %arg6: memref<256x128xbf16, #tpu.memory_space<vmem>>, %arg7: memref<1x128xf32, #tpu.memory_space<vmem>>, %arg8: memref<128x128xbf16, #tpu.memory_space<vmem>>, %arg9: memref<1x128xf32, #tpu.memory_space<vmem>>, %arg10: memref<128x16xbf16, #tpu.memory_space<vmem>>, %arg11: memref<1x16xf32, #tpu.memory_space<vmem>>, %arg12: memref<8x16xf32, #tpu.memory_space<vmem>>) attributes {dimension_semantics = [#tpu.dimension_semantics<parallel>], iteration_bounds = array<i64: 1>, scalar_prefetch = 0 : i64, scratch_operands = 0 : i64, tpu.core_type = #tpu.core_type<tc>, window_params = [{transform_indices = @transform_0, window_bounds = array<i64: 8, 64>}, {pipeline_mode = #tpu.pipeline_mode<synchronous>, transform_indices = @transform_1, window_bounds = array<i64: 64, 512>}, {pipeline_mode = #tpu.pipeline_mode<synchronous>, transform_indices = @transform_2, window_bounds = array<i64: 1, 512>}, {pipeline_mode = #tpu.pipeline_mode<synchronous>, transform_indices = @transform_3, window_bounds = array<i64: 512, 256>}, {pipeline_mode = #tpu.pipeline_mode<synchronous>, transform_indices = @transform_4, window_bounds = array<i64: 1, 256>}, {pipeline_mode = #tpu.pipeline_mode<synchronous>, transform_indices = @transform_5, window_bounds = array<i64: 256, 128>}, {pipeline_mode = #tpu.pipeline_mode<synchronous>, transform_indices = @transform_6, window_bounds = array<i64: 1, 128>}, {pipeline_mode = #tpu.pipeline_mode<synchronous>, transform_indices = @transform_7, window_bounds = array<i64: 128, 128>}, {pipeline_mode = #tpu.pipeline_mode<synchronous>, transform_indices = @transform_8, window_bounds = array<i64: 1, 128>}, {pipeline_mode = #tpu.pipeline_mode<synchronous>, transform_indices = @transform_9, window_bounds = array<i64: 128, 16>}, {pipeline_mode = #tpu.pipeline_mode<synchronous>, transform_indices = @transform_10, window_bounds = array<i64: 1, 16>}, {transform_indices = @transform_11, window_bounds = array<i64: 8, 16>}]} {
    %c0 = arith.constant 0 : index
    %c0_0 = arith.constant 0 : index
    %0 = vector.load %arg1[%c0, %c0_0] : memref<8x64xf32, #tpu.memory_space<vmem>>, vector<8x64xf32>
    %1 = arith.truncf %0 : vector<8x64xf32> to vector<8x64xbf16>
    %c0_1 = arith.constant 0 : index
    %c0_2 = arith.constant 0 : index
    %2 = vector.load %arg2[%c0_1, %c0_2] : memref<64x512xbf16, #tpu.memory_space<vmem>>, vector<64x512xbf16>
    %cst = arith.constant dense<0.000000e+00> : vector<8x512xf32>
    %3 = tpu.matmul %1, %2, %cst {dimension_numbers = #tpu.dot_dimension_numbers<[1], [0], [0], [1], [0, 0, 1, 1], [], []>} : vector<8x64xbf16>, vector<64x512xbf16>, vector<8x512xf32> -> vector<8x512xf32>
    %c0_3 = arith.constant 0 : index
    %c0_4 = arith.constant 0 : index
    %4 = vector.load %arg3[%c0_3, %c0_4] : memref<1x512xf32, #tpu.memory_space<vmem>>, vector<1x512xf32>
    %5 = vector.broadcast %4 : vector<1x512xf32> to vector<8x512xf32>
    %6 = arith.addf %3, %5 : vector<8x512xf32>
    %cst_5 = arith.constant 0.000000e+00 : f32
    %7 = vector.broadcast %cst_5 : f32 to vector<8x512xf32>
    %8 = arith.maximumf %6, %7 : vector<8x512xf32>
    %9 = arith.truncf %8 : vector<8x512xf32> to vector<8x512xbf16>
    %c0_6 = arith.constant 0 : index
    %c0_7 = arith.constant 0 : index
    %10 = vector.load %arg4[%c0_6, %c0_7] : memref<512x256xbf16, #tpu.memory_space<vmem>>, vector<512x256xbf16>
    %cst_8 = arith.constant dense<0.000000e+00> : vector<8x256xf32>
    %11 = tpu.matmul %9, %10, %cst_8 {dimension_numbers = #tpu.dot_dimension_numbers<[1], [0], [0], [1], [0, 0, 1, 1], [], []>} : vector<8x512xbf16>, vector<512x256xbf16>, vector<8x256xf32> -> vector<8x256xf32>
    %c0_9 = arith.constant 0 : index
    %c0_10 = arith.constant 0 : index
    %12 = vector.load %arg5[%c0_9, %c0_10] : memref<1x256xf32, #tpu.memory_space<vmem>>, vector<1x256xf32>
    %13 = vector.broadcast %12 : vector<1x256xf32> to vector<8x256xf32>
    %14 = arith.addf %11, %13 : vector<8x256xf32>
    %cst_11 = arith.constant 0.000000e+00 : f32
    %15 = vector.broadcast %cst_11 : f32 to vector<8x256xf32>
    %16 = arith.maximumf %14, %15 : vector<8x256xf32>
    %17 = arith.truncf %16 : vector<8x256xf32> to vector<8x256xbf16>
    %c0_12 = arith.constant 0 : index
    %c0_13 = arith.constant 0 : index
    %18 = vector.load %arg6[%c0_12, %c0_13] : memref<256x128xbf16, #tpu.memory_space<vmem>>, vector<256x128xbf16>
    %cst_14 = arith.constant dense<0.000000e+00> : vector<8x128xf32>
    %19 = tpu.matmul %17, %18, %cst_14 {dimension_numbers = #tpu.dot_dimension_numbers<[1], [0], [0], [1], [0, 0, 1, 1], [], []>} : vector<8x256xbf16>, vector<256x128xbf16>, vector<8x128xf32> -> vector<8x128xf32>
    %c0_15 = arith.constant 0 : index
    %c0_16 = arith.constant 0 : index
    %20 = vector.load %arg7[%c0_15, %c0_16] : memref<1x128xf32, #tpu.memory_space<vmem>>, vector<1x128xf32>
    %21 = vector.broadcast %20 : vector<1x128xf32> to vector<8x128xf32>
    %22 = arith.addf %19, %21 : vector<8x128xf32>
    %cst_17 = arith.constant 0.000000e+00 : f32
    %23 = vector.broadcast %cst_17 : f32 to vector<8x128xf32>
    %24 = arith.maximumf %22, %23 : vector<8x128xf32>
    %25 = arith.truncf %24 : vector<8x128xf32> to vector<8x128xbf16>
    %c0_18 = arith.constant 0 : index
    %c0_19 = arith.constant 0 : index
    %26 = vector.load %arg8[%c0_18, %c0_19] : memref<128x128xbf16, #tpu.memory_space<vmem>>, vector<128x128xbf16>
    %cst_20 = arith.constant dense<0.000000e+00> : vector<8x128xf32>
    %27 = tpu.matmul %25, %26, %cst_20 {dimension_numbers = #tpu.dot_dimension_numbers<[1], [0], [0], [1], [0, 0, 1, 1], [], []>} : vector<8x128xbf16>, vector<128x128xbf16>, vector<8x128xf32> -> vector<8x128xf32>
    %c0_21 = arith.constant 0 : index
    %c0_22 = arith.constant 0 : index
    %28 = vector.load %arg9[%c0_21, %c0_22] : memref<1x128xf32, #tpu.memory_space<vmem>>, vector<1x128xf32>
    %29 = vector.broadcast %28 : vector<1x128xf32> to vector<8x128xf32>
    %30 = arith.addf %27, %29 : vector<8x128xf32>
    %cst_23 = arith.constant 0.000000e+00 : f32
    %31 = vector.broadcast %cst_23 : f32 to vector<8x128xf32>
    %32 = arith.maximumf %30, %31 : vector<8x128xf32>
    %33 = arith.truncf %32 : vector<8x128xf32> to vector<8x128xbf16>
    %c0_24 = arith.constant 0 : index
    %c0_25 = arith.constant 0 : index
    %34 = vector.load %arg10[%c0_24, %c0_25] : memref<128x16xbf16, #tpu.memory_space<vmem>>, vector<128x16xbf16>
    %cst_26 = arith.constant dense<0.000000e+00> : vector<8x16xf32>
    %35 = tpu.matmul %33, %34, %cst_26 {dimension_numbers = #tpu.dot_dimension_numbers<[1], [0], [0], [1], [0, 0, 1, 1], [], []>} : vector<8x128xbf16>, vector<128x16xbf16>, vector<8x16xf32> -> vector<8x16xf32>
    %c0_27 = arith.constant 0 : index
    %c0_28 = arith.constant 0 : index
    %36 = vector.load %arg11[%c0_27, %c0_28] : memref<1x16xf32, #tpu.memory_space<vmem>>, vector<1x16xf32>
    %37 = vector.broadcast %36 : vector<1x16xf32> to vector<8x16xf32>
    %38 = arith.addf %35, %37 : vector<8x16xf32>
    %c0_29 = arith.constant 0 : index
    %c0_30 = arith.constant 0 : index
    %39 = vector.load %arg12[%c0_29, %c0_30] : memref<8x16xf32, #tpu.memory_space<vmem>>, vector<8x16xf32>
    tpu.vector_store %arg12[%c0_29, %c0_30], %38 {strides = array<i32>} : memref<8x16xf32, #tpu.memory_space<vmem>>, vector<8x16xf32>,
    return
  }
  func.func @transform_0(%arg0: i32) -> (i32, i32) {
    %c0_i32 = arith.constant 0 : i32
    %c0_i32_0 = arith.constant 0 : i32
    return %arg0, %c0_i32 : i32, i32
  }
  func.func @transform_1(%arg0: i32) -> (i32, i32) {
    %c0_i32 = arith.constant 0 : i32
    %c0_i32_0 = arith.constant 0 : i32
    %c0_i32_1 = arith.constant 0 : i32
    return %c0_i32, %c0_i32_0 : i32, i32
  }
  func.func @transform_2(%arg0: i32) -> (i32, i32) {
    %c0_i32 = arith.constant 0 : i32
    %c0_i32_0 = arith.constant 0 : i32
    %c0_i32_1 = arith.constant 0 : i32
    return %c0_i32, %c0_i32_0 : i32, i32
  }
  func.func @transform_3(%arg0: i32) -> (i32, i32) {
    %c0_i32 = arith.constant 0 : i32
    %c0_i32_0 = arith.constant 0 : i32
    %c0_i32_1 = arith.constant 0 : i32
    return %c0_i32, %c0_i32_0 : i32, i32
  }
  func.func @transform_4(%arg0: i32) -> (i32, i32) {
    %c0_i32 = arith.constant 0 : i32
    %c0_i32_0 = arith.constant 0 : i32
    %c0_i32_1 = arith.constant 0 : i32
    return %c0_i32, %c0_i32_0 : i32, i32
  }
  func.func @transform_5(%arg0: i32) -> (i32, i32) {
    %c0_i32 = arith.constant 0 : i32
    %c0_i32_0 = arith.constant 0 : i32
    %c0_i32_1 = arith.constant 0 : i32
    return %c0_i32, %c0_i32_0 : i32, i32
  }
  func.func @transform_6(%arg0: i32) -> (i32, i32) {
    %c0_i32 = arith.constant 0 : i32
    %c0_i32_0 = arith.constant 0 : i32
    %c0_i32_1 = arith.constant 0 : i32
    return %c0_i32, %c0_i32_0 : i32, i32
  }
  func.func @transform_7(%arg0: i32) -> (i32, i32) {
    %c0_i32 = arith.constant 0 : i32
    %c0_i32_0 = arith.constant 0 : i32
    %c0_i32_1 = arith.constant 0 : i32
    return %c0_i32, %c0_i32_0 : i32, i32
  }
  func.func @transform_8(%arg0: i32) -> (i32, i32) {
    %c0_i32 = arith.constant 0 : i32
    %c0_i32_0 = arith.constant 0 : i32
    %c0_i32_1 = arith.constant 0 : i32
    return %c0_i32, %c0_i32_0 : i32, i32
  }
  func.func @transform_9(%arg0: i32) -> (i32, i32) {
    %c0_i32 = arith.constant 0 : i32
    %c0_i32_0 = arith.constant 0 : i32
    %c0_i32_1 = arith.constant 0 : i32
    return %c0_i32, %c0_i32_0 : i32, i32
  }
  func.func @transform_10(%arg0: i32) -> (i32, i32) {
    %c0_i32 = arith.constant 0 : i32
    %c0_i32_0 = arith.constant 0 : i32
    %c0_i32_1 = arith.constant 0 : i32
    return %c0_i32, %c0_i32_0 : i32, i32
  }
  func.func @transform_11(%arg0: i32) -> (i32, i32) {
    %c0_i32 = arith.constant 0 : i32
    %c0_i32_0 = arith.constant 0 : i32
    return %arg0, %c0_i32 : i32, i32
  }
}

</mosaic_0001>

<llo_original>
// kernel: tpu_custom_call.1
$region0: #{tpu_custom_call.1}
  #allocation0 [shape = 'u32[]', space=smem, size = 0x4, offset = 0x4, fixed_abs, tag = 'smem constant byte address 0x4 - core index']
  #allocation1 [shape = 'u32[144,128]{1,0:T(1,128)}', space=vmem, size = 0x12000, scoped, tag = 'internal scratch']
  %s0 = inlined_call_operand.vmem [shape: f32[8,64], index: 0, kind: input, shape index: {}]
  %s1 = inlined_call_operand.hbm [shape: bf16[64,512], index: 1, kind: input, shape index: {}]
  %s2 = inlined_call_operand.vmem [shape: f32[1,512], index: 2, kind: input, shape index: {}]
  %s3 = inlined_call_operand.hbm [shape: bf16[512,256], index: 3, kind: input, shape index: {}]
  %s4 = inlined_call_operand.vmem [shape: f32[1,256], index: 4, kind: input, shape index: {}]
  %s5 = inlined_call_operand.hbm [shape: bf16[256,128], index: 5, kind: input, shape index: {}]
  %s6 = inlined_call_operand.vmem [shape: f32[1,128], index: 6, kind: input, shape index: {}]
  %s7 = inlined_call_operand.vmem [shape: bf16[128,128], index: 7, kind: input, shape index: {}]
  %s8 = inlined_call_operand.vmem [shape: f32[1,128], index: 8, kind: input, shape index: {}]
  %s9 = inlined_call_operand.vmem [shape: bf16[128,16], index: 9, kind: input, shape index: {}]
  %s10 = inlined_call_operand.vmem [shape: f32[1,16], index: 10, kind: input, shape index: {}]
  %s11 = inlined_call_operand.hbm [shape: f32[8,16], index: 11, kind: output, shape index: {}]
  %s12 = sld [smem:[#allocation0]]
  $region66: #{tpu_custom_call.1} parent=0
    _
  %s14 = ssub.s32 1, %s12
  %s15 = scalar_select 0, %s14, %s12
  $region1: #{tpu_custom_call.1} parent=0
    #allocation2 [shape = 'u8[65536]{0}', space=vmem, size = 0x10000, scoped, tag = 'input window, operand 1, single buffered']
    #allocation3 [shape = 's32[1]{0}', space=sflag, size = 0x4, scoped, tag = 'scoped memory for tpu_custom_call.1']
    #allocation4 [shape = 's32[1]{0}', space=sflag, size = 0x4, scoped, tag = 'scoped memory for tpu_custom_call.1']
    #allocation5 [shape = 'u8[262144]{0}', space=vmem, size = 0x40000, scoped, tag = 'input window, operand 3, single buffered']
    #allocation6 [shape = 's32[1]{0}', space=sflag, size = 0x4, scoped, tag = 'scoped memory for tpu_custom_call.1']
    #allocation7 [shape = 'u8[65536]{0}', space=vmem, size = 0x10000, scoped, tag = 'input window, operand 5, single buffered']
    #allocation8 [shape = 'u8[4096]{0}', space=vmem, size = 0x1000, scoped, tag = 'output window, operand 0, single buffered']
    %16 = vsyncpa [#allocation3], 0
    %17 = vsyncpa [#allocation6], 0
    %18 = vsyncpa [#allocation4], 0
    // Predicated region
    $region2: #{tpu_custom_call.1} parent=1 // pred_check
      _
    $region3: #{tpu_custom_call.1} parent=1 // pred_check_branch
      %20 = sbr.rel (0) target = $region5
    $region4: #{tpu_custom_call.1} parent=1 // pred_region
      _
    $region5: #{tpu_custom_call.1} parent=1 // pred_fallthru
      _
    // Predicated region
    $region6: #{tpu_custom_call.1} parent=1 // pred_check
      _
    $region7: #{tpu_custom_call.1} parent=1 // pred_check_branch
      %22 = sbr.rel (0) target = $region9
    $region8: #{tpu_custom_call.1} parent=1 // pred_region
      %s24 = ssub.s32 2048, 2048
      %25 = vsyncadd [#allocation3], %s24
      %s26 = sshll.u32 [#allocation2], 4
      %s27 = int_to_ptr.vmem [resolvable:$true] %s26
      %32 = dma.hbm_to_vmem [thread:$0]  %s1, 2048, %s27, [#allocation3], 256, 256, 16
    $region9: #{tpu_custom_call.1} parent=1 // pred_fallthru
      _
    // Predicated region
    $region10: #{tpu_custom_call.1} parent=1 // pred_check
      _
    $region11: #{tpu_custom_call.1} parent=1 // pred_check_branch
      %34 = sbr.rel (0) target = $region13
    $region12: #{tpu_custom_call.1} parent=1 // pred_region
      _
    $region13: #{tpu_custom_call.1} parent=1 // pred_fallthru
      _
    // Predicated region
    $region14: #{tpu_custom_call.1} parent=1 // pred_check
      _
    $region15: #{tpu_custom_call.1} parent=1 // pred_check_branch
      %36 = sbr.rel (0) target = $region17
    $region16: #{tpu_custom_call.1} parent=1 // pred_region
      %s38 = ssub.s32 8192, 8192
      %39 = vsyncadd [#allocation6], %s38
      %s40 = sshll.u32 [#allocation5], 4
      %s41 = int_to_ptr.vmem [resolvable:$true] %s40
      %46 = dma.hbm_to_vmem [thread:$0]  %s3, 8192, %s41, [#allocation6], 128, 128, 8
    $region17: #{tpu_custom_call.1} parent=1 // pred_fallthru
      _
    // Predicated region
    $region18: #{tpu_custom_call.1} parent=1 // pred_check
      _
    $region19: #{tpu_custom_call.1} parent=1 // pred_check_branch
      %48 = sbr.rel (0) target = $region21
    $region20: #{tpu_custom_call.1} parent=1 // pred_region
      _
    $region21: #{tpu_custom_call.1} parent=1 // pred_fallthru
      _
    // Predicated region
    $region22: #{tpu_custom_call.1} parent=1 // pred_check
      _
    $region23: #{tpu_custom_call.1} parent=1 // pred_check_branch
      %50 = sbr.rel (0) target = $region25
    $region24: #{tpu_custom_call.1} parent=1 // pred_region
      %s52 = ssub.s32 2048, 2048
      %53 = vsyncadd [#allocation6], %s52
      %s54 = sshll.u32 [#allocation7], 4
      %s55 = int_to_ptr.vmem [resolvable:$true] %s54
      %60 = dma.hbm_to_vmem [thread:$0]  %s5, 2048, %s55, [#allocation6], 64, 64, 4
    $region25: #{tpu_custom_call.1} parent=1 // pred_fallthru
      _
    // Predicated region
    $region26: #{tpu_custom_call.1} parent=1 // pred_check
      _
    $region27: #{tpu_custom_call.1} parent=1 // pred_check_branch
      %62 = sbr.rel (0) target = $region29
    $region28: #{tpu_custom_call.1} parent=1 // pred_region
      _
    $region29: #{tpu_custom_call.1} parent=1 // pred_fallthru
      _
    // Predicated region
    $region30: #{tpu_custom_call.1} parent=1 // pred_check
      _
    $region31: #{tpu_custom_call.1} parent=1 // pred_check_branch
      %64 = sbr.rel (0) target = $region33
    $region32: #{tpu_custom_call.1} parent=1 // pred_region
      _
    $region33: #{tpu_custom_call.1} parent=1 // pred_fallthru
      _
    // Predicated region
    $region34: #{tpu_custom_call.1} parent=1 // pred_check
      _
    $region35: #{tpu_custom_call.1} parent=1 // pred_check_branch
      %66 = sbr.rel (0) target = $region37
    $region36: #{tpu_custom_call.1} parent=1 // pred_region
      _
    $region37: #{tpu_custom_call.1} parent=1 // pred_fallthru
      _
    // Predicated region
    $region38: #{tpu_custom_call.1} parent=1 // pred_check
      _
    $region39: #{tpu_custom_call.1} parent=1 // pred_check_branch
      %68 = sbr.rel (0) target = $region41
    $region40: #{tpu_custom_call.1} parent=1 // pred_region
      _
    $region41: #{tpu_custom_call.1} parent=1 // pred_fallthru
      _
    // Predicated region
    $region42: #{tpu_custom_call.1} parent=1 // pred_check
      _
    $region43: #{tpu_custom_call.1} parent=1 // pred_check_branch
      %70 = sbr.rel (0) target = $region45
    $region44: #{tpu_custom_call.1} parent=1 // pred_region
      _
    $region45: #{tpu_custom_call.1} parent=1 // pred_fallthru
      _
    // Predicated region
    $region46: #{tpu_custom_call.1} parent=1 // pred_check
      _
    $region47: #{tpu_custom_call.1} parent=1 // pred_check_branch
      %72 = sbr.rel (0) target = $region49
    $region48: #{tpu_custom_call.1} parent=1 // pred_region
      %73 = dma.done [#allocation3], 2048
    $region49: #{tpu_custom_call.1} parent=1 // pred_fallthru
      _
    // Predicated region
    $region50: #{tpu_custom_call.1} parent=1 // pred_check
      _
    $region51: #{tpu_custom_call.1} parent=1 // pred_check_branch
      %75 = sbr.rel (0) target = $region53
    $region52: #{tpu_custom_call.1} parent=1 // pred_region
      %76 = dma.done [#allocation6], 8192
    $region53: #{tpu_custom_call.1} parent=1 // pred_fallthru
      _
    // Predicated region
    $region54: #{tpu_custom_call.1} parent=1 // pred_check
      _
    $region55: #{tpu_custom_call.1} parent=1 // pred_check_branch
      %78 = sbr.rel (0) target = $region57
    $region56: #{tpu_custom_call.1} parent=1 // pred_region
      %79 = dma.done [#allocation6], 2048
    $region57: #{tpu_custom_call.1} parent=1 // pred_fallthru
      _
    %v81 = vld [vmem:[%s0] sm:$0xff]
    %v82 = vpack.c.bf16 %v81, %v81
    %v83 = vld [vmem:[#allocation2] sm:$0xff]
    %v84 = vld [vmem:[#allocation2 + $0x8] sm:$0xff]
    %v85 = vld [vmem:[#allocation2 + $0x10] sm:$0xff]
    %v86 = vld [vmem:[#allocation2 + $0x18] sm:$0xff]
    %v87 = vld [vmem:[#allocation2 + $0x20] sm:$0xff]
    %v88 = vld [vmem:[#allocation2 + $0x28] sm:$0xff]
    %v89 = vld [vmem:[#allocation2 + $0x30] sm:$0xff]
    %v90 = vld [vmem:[#allocation2 + $0x38] sm:$0xff]
    %v91 = vld [vmem:[#allocation2 + $0x40] sm:$0xff]
    %v92 = vld [vmem:[#allocation2 + $0x48] sm:$0xff]
    %v93 = vld [vmem:[#allocation2 + $0x50] sm:$0xff]
    %v94 = vld [vmem:[#allocation2 + $0x58] sm:$0xff]
    %v95 = vld [vmem:[#allocation2 + $0x60] sm:$0xff]
    %v96 = vld [vmem:[#allocation2 + $0x68] sm:$0xff]
    %v97 = vld [vmem:[#allocation2 + $0x70] sm:$0xff]
    %v98 = vld [vmem:[#allocation2 + $0x78] sm:$0xff]
    %v99 = vld [vmem:[%s2] sm:$0xf]
    %v101 = vlaneseq
    %v102 = vshrl.u32 %v101, 7
    %v103 = vsub.s32 0, %v102
    %v104 = vrot.slane %v99, %v103
    %v105 = vlaneseq
    %v106 = vshrl.u32 %v105, 7
    %v107 = vsub.s32 1, %v106
    %v108 = vrot.slane %v99, %v107
    %v109 = vlaneseq
    %v110 = vshrl.u32 %v109, 7
    %v111 = vsub.s32 2, %v110
    %v112 = vrot.slane %v99, %v111
    %v113 = vlaneseq
    %v114 = vshrl.u32 %v113, 7
    %v115 = vsub.s32 3, %v114
    %v116 = vrot.slane %v99, %v115
    %v137 = vunpack.c.l.b16 %v83
    %v138 = vunpack.c.h.b16 %v83
    %v139 = vunpack.c.l.b16 %v84
    %v140 = vunpack.c.h.b16 %v84
    %v141 = vunpack.c.l.b16 %v85
    %v142 = vunpack.c.h.b16 %v85
    %v143 = vunpack.c.l.b16 %v86
    %v144 = vunpack.c.h.b16 %v86
    %v145 = vunpack.c.l.b16 %v87
    %v146 = vunpack.c.h.b16 %v87
    %v147 = vunpack.c.l.b16 %v88
    %v148 = vunpack.c.h.b16 %v88
    %v149 = vunpack.c.l.b16 %v89
    %v150 = vunpack.c.h.b16 %v89
    %v151 = vunpack.c.l.b16 %v90
    %v152 = vunpack.c.h.b16 %v90
    %v153 = vunpack.c.l.b16 %v91
    %v154 = vunpack.c.h.b16 %v91
    %v155 = vunpack.c.l.b16 %v92
    %v156 = vunpack.c.h.b16 %v92
    %v157 = vunpack.c.l.b16 %v93
    %v158 = vunpack.c.h.b16 %v93
    %v159 = vunpack.c.l.b16 %v94
    %v160 = vunpack.c.h.b16 %v94
    %v161 = vunpack.c.l.b16 %v95
    %v162 = vunpack.c.h.b16 %v95
    %v163 = vunpack.c.l.b16 %v96
    %v164 = vunpack.c.h.b16 %v96
    %v165 = vunpack.c.l.b16 %v97
    %v166 = vunpack.c.h.b16 %v97
    %v167 = vunpack.c.l.b16 %v98
    %v168 = vunpack.c.h.b16 %v98
    %v169 = vpack.c.b16 %v141, %v137
    %v170 = vpack.c.b16 %v142, %v138
    %v171 = vpack.c.b16 %v143, %v139
    %v172 = vpack.c.b16 %v144, %v140
    %v173 = vpack.c.b16 %v149, %v145
    %v174 = vpack.c.b16 %v150, %v146
    %v175 = vpack.c.b16 %v151, %v147
    %v176 = vpack.c.b16 %v152, %v148
    %v177 = vpack.c.b16 %v157, %v153
    %v178 = vpack.c.b16 %v158, %v154
    %v179 = vpack.c.b16 %v159, %v155
    %v180 = vpack.c.b16 %v160, %v156
    %v181 = vpack.c.b16 %v165, %v161
    %v182 = vpack.c.b16 %v166, %v162
    %v183 = vpack.c.b16 %v167, %v163
    %v184 = vpack.c.b16 %v168, %v164
    %vm201 = vcmask 523264
    %v203 = vsel %vm201, %v82, 0
    %205 = vmatprep.subr.bf16.mxu0 %v170
    %206 = vmatpush1.bf16.msra.mxu0 %v169
    %207 = vmatprep.subr.bf16.mxu0 %v174
    %208 = vmatpush1.bf16.msra.mxu0 %v173
    %209 = vmatprep.subr.bf16.mxu0 %v178
    %210 = vmatpush1.bf16.msra.mxu0 %v177
    %211 = vmatprep.subr.bf16.mxu0 %v182
    %212 = vmatpush1.bf16.msra.mxu0 %v181
    %213 = vmatprep.subr.bf16.mxu0 0
    %214 = vmatpush1.bf16.msra.mxu0 0
    %215 = vmatprep.subr.bf16.mxu0 0
    %216 = vmatpush1.bf16.msra.mxu0 0
    %217 = vmatprep.subr.bf16.mxu0 0
    %218 = vmatpush1.bf16.msra.mxu0 0
    %219 = vmatprep.subr.bf16.mxu0 0
    %220 = vmatpush1.bf16.msra.mxu0 0
    %221 = vmatprep.subr.bf16.mxu0 0
    %222 = vmatpush1.bf16.msra.mxu0 0
    %223 = vmatprep.subr.bf16.mxu0 0
    %224 = vmatpush1.bf16.msra.mxu0 0
    %225 = vmatprep.subr.bf16.mxu0 0
    %226 = vmatpush1.bf16.msra.mxu0 0
    %227 = vmatprep.subr.bf16.mxu0 0
    %228 = vmatpush1.bf16.msra.mxu0 0
    %229 = vmatprep.subr.bf16.mxu0 0
    %230 = vmatpush1.bf16.msra.mxu0 0
    %231 = vmatprep.subr.bf16.mxu0 0
    %232 = vmatpush1.bf16.msra.mxu0 0
    %233 = vmatprep.subr.bf16.mxu0 0
    %234 = vmatpush1.bf16.msra.mxu0 0
    %235 = vmatprep.subr.bf16.mxu0 0
    %236 = vmatpush1.bf16.msra.mxu0 0
    %237 = vmatprep.mubr.bf16.mxu0 0
    %238 = vmatmul.mubr.bf16.gmra.mrb[0].mxu0 %v203
    %v239 = vpop.f32.mrb[0].mxu0
    %v240 = vadd.f32 %v104, %v239
    %v241 = vpop.f32.mrb[0].mxu0
    %v242 = vadd.f32 %v108, %v241
    %v243 = vpop.f32.mrb[0].mxu0
    %v244 = vpop.f32.mrb[0].mxu0
    %245 = vdwg.mxu0
    %246 = vmatprep.subr.bf16.mxu0 %v172
    %247 = vmatpush1.bf16.msra.mxu0 %v171
    %248 = vmatprep.subr.bf16.mxu0 %v176
    %249 = vmatpush1.bf16.msra.mxu0 %v175
    %250 = vmatprep.subr.bf16.mxu0 %v180
    %251 = vmatpush1.bf16.msra.mxu0 %v179
    %252 = vmatprep.subr.bf16.mxu0 %v184
    %253 = vmatpush1.bf16.msra.mxu0 %v183
    %254 = vmatprep.subr.bf16.mxu0 0
    %255 = vmatpush1.bf16.msra.mxu0 0
    %256 = vmatprep.subr.bf16.mxu0 0
    %257 = vmatpush1.bf16.msra.mxu0 0
    %258 = vmatprep.subr.bf16.mxu0 0
    %259 = vmatpush1.bf16.msra.mxu0 0
    %260 = vmatprep.subr.bf16.mxu0 0
    %261 = vmatpush1.bf16.msra.mxu0 0
    %262 = vmatprep.subr.bf16.mxu0 0
    %263 = vmatpush1.bf16.msra.mxu0 0
    %264 = vmatprep.subr.bf16.mxu0 0
    %265 = vmatpush1.bf16.msra.mxu0 0
    %266 = vmatprep.subr.bf16.mxu0 0
    %267 = vmatpush1.bf16.msra.mxu0 0
    %268 = vmatprep.subr.bf16.mxu0 0
    %269 = vmatpush1.bf16.msra.mxu0 0
    %270 = vmatprep.subr.bf16.mxu0 0
    %271 = vmatpush1.bf16.msra.mxu0 0
    %272 = vmatprep.subr.bf16.mxu0 0
    %273 = vmatpush1.bf16.msra.mxu0 0
    %274 = vmatprep.subr.bf16.mxu0 0
    %275 = vmatpush1.bf16.msra.mxu0 0
    %276 = vmatprep.subr.bf16.mxu0 0
    %277 = vmatpush1.bf16.msra.mxu0 0
    %278 = vmatprep.mubr.bf16.mxu0 0
    %279 = vmatmul.mubr.bf16.gmra.mrb[0].mxu0 %v203
    %v280 = vpop.f32.mrb[0].mxu0
    %v281 = vadd.f32 %v112, %v280
    %v282 = vpop.f32.mrb[0].mxu0
    %v283 = vadd.f32 %v116, %v282
    %v284 = vpop.f32.mrb[0].mxu0
    %v285 = vpop.f32.mrb[0].mxu0
    %286 = vdwg.mxu0
    %v287 = vmax.f32 %v240, 0.0
    %v288 = vmax.f32 %v242, 0.0
    %v289 = vmax.f32 %v281, 0.0
    %v290 = vmax.f32 %v283, 0.0
    %v291 = vpack.c.bf16 %v287, %v287
    %v292 = vpack.c.bf16 %v288, %v288
    %v293 = vpack.c.bf16 %v289, %v289
    %v294 = vpack.c.bf16 %v290, %v290
    %v295 = vld [vmem:[#allocation5] sm:$0xff]
    %v296 = vld [vmem:[#allocation5 + $0x8] sm:$0xff]
    %v297 = vld [vmem:[#allocation5 + $0x10] sm:$0xff]
    %v298 = vld [vmem:[#allocation5 + $0x18] sm:$0xff]
    %v299 = vld [vmem:[#allocation5 + $0x20] sm:$0xff]
    %v300 = vld [vmem:[#allocation5 + $0x28] sm:$0xff]
    %v301 = vld [vmem:[#allocation5 + $0x30] sm:$0xff]
    %v302 = vld [vmem:[#allocation5 + $0x38] sm:$0xff]
    %v303 = vld [vmem:[#allocation5 + $0x40] sm:$0xff]
    %v304 = vld [vmem:[#allocation5 + $0x48] sm:$0xff]
    %v305 = vld [vmem:[#allocation5 + $0x50] sm:$0xff]
    %v306 = vld [vmem:[#allocation5 + $0x58] sm:$0xff]
    %v307 = vld [vmem:[#allocation5 + $0x60] sm:$0xff]
    %v308 = vld [vmem:[#allocation5 + $0x68] sm:$0xff]
    %v309 = vld [vmem:[#allocation5 + $0x70] sm:$0xff]
    %v310 = vld [vmem:[#allocation5 + $0x78] sm:$0xff]
    %v311 = vld [vmem:[#allocation5 + $0x80] sm:$0xff]
    %v312 = vld [vmem:[#allocation5 + $0x88] sm:$0xff]
    %v313 = vld [vmem:[#allocation5 + $0x90] sm:$0xff]
    %v314 = vld [vmem:[#allocation5 + $0x98] sm:$0xff]
    %v315 = vld [vmem:[#allocation5 + $0xa0] sm:$0xff]
    %v316 = vld [vmem:[#allocation5 + $0xa8] sm:$0xff]
    %v317 = vld [vmem:[#allocation5 + $0xb0] sm:$0xff]
    %v318 = vld [vmem:[#allocation5 + $0xb8] sm:$0xff]
    %v319 = vld [vmem:[#allocation5 + $0xc0] sm:$0xff]
    %v320 = vld [vmem:[#allocation5 + $0xc8] sm:$0xff]
    %v321 = vld [vmem:[#allocation5 + $0xd0] sm:$0xff]
    %v322 = vld [vmem:[#allocation5 + $0xd8] sm:$0xff]
    %v323 = vld [vmem:[#allocation5 + $0xe0] sm:$0xff]
    %v324 = vld [vmem:[#allocation5 + $0xe8] sm:$0xff]
    %v325 = vld [vmem:[#allocation5 + $0xf0] sm:$0xff]
    %v326 = vld [vmem:[#allocation5 + $0xf8] sm:$0xff]
    %v327 = vld [vmem:[#allocation5 + $0x100] sm:$0xff]
    %v328 = vld [vmem:[#allocation5 + $0x108] sm:$0xff]
    %v329 = vld [vmem:[#allocation5 + $0x110] sm:$0xff]
    %v330 = vld [vmem:[#allocation5 + $0x118] sm:$0xff]
    %v331 = vld [vmem:[#allocation5 + $0x120] sm:$0xff]
    %v332 = vld [vmem:[#allocation5 + $0x128] sm:$0xff]
    %v333 = vld [vmem:[#allocation5 + $0x130] sm:$0xff]
    %v334 = vld [vmem:[#allocation5 + $0x138] sm:$0xff]
    %v335 = vld [vmem:[#allocation5 + $0x140] sm:$0xff]
    %v336 = vld [vmem:[#allocation5 + $0x148] sm:$0xff]
    %v337 = vld [vmem:[#allocation5 + $0x150] sm:$0xff]
    %v338 = vld [vmem:[#allocation5 + $0x158] sm:$0xff]
    %v339 = vld [vmem:[#allocation5 + $0x160] sm:$0xff]
    %v340 = vld [vmem:[#allocation5 + $0x168] sm:$0xff]
    %v341 = vld [vmem:[#allocation5 + $0x170] sm:$0xff]
    %v342 = vld [vmem:[#allocation5 + $0x178] sm:$0xff]
    %v343 = vld [vmem:[#allocation5 + $0x180] sm:$0xff]
    %v344 = vld [vmem:[#allocation5 + $0x188] sm:$0xff]
    %v345 = vld [vmem:[#allocation5 + $0x190] sm:$0xff]
    %v346 = vld [vmem:[#allocation5 + $0x198] sm:$0xff]
    %v347 = vld [vmem:[#allocation5 + $0x1a0] sm:$0xff]
    %v348 = vld [vmem:[#allocation5 + $0x1a8] sm:$0xff]
    %v349 = vld [vmem:[#allocation5 + $0x1b0] sm:$0xff]
    %v350 = vld [vmem:[#allocation5 + $0x1b8] sm:$0xff]
    %v351 = vld [vmem:[#allocation5 + $0x1c0] sm:$0xff]
    %v352 = vld [vmem:[#allocation5 + $0x1c8] sm:$0xff]
    %v353 = vld [vmem:[#allocation5 + $0x1d0] sm:$0xff]
    %v354 = vld [vmem:[#allocation5 + $0x1d8] sm:$0xff]
    %v355 = vld [vmem:[#allocation5 + $0x1e0] sm:$0xff]
    %v356 = vld [vmem:[#allocation5 + $0x1e8] sm:$0xff]
    %v357 = vld [vmem:[#allocation5 + $0x1f0] sm:$0xff]
    %v358 = vld [vmem:[#allocation5 + $0x1f8] sm:$0xff]
    %v359 = vld [vmem:[%s4] sm:$0x3]
    %v361 = vlaneseq
    %v362 = vshrl.u32 %v361, 7
    %v363 = vsub.s32 0, %v362
    %v364 = vrot.slane %v359, %v363
    %v365 = vlaneseq
    %v366 = vshrl.u32 %v365, 7
    %v367 = vsub.s32 1, %v366
    %v368 = vrot.slane %v359, %v367
    %v435 = vunpack.c.l.b16 %v295
    %v436 = vunpack.c.h.b16 %v295
    %v437 = vunpack.c.l.b16 %v296
    %v438 = vunpack.c.h.b16 %v296
    %v439 = vunpack.c.l.b16 %v297
    %v440 = vunpack.c.h.b16 %v297
    %v441 = vunpack.c.l.b16 %v298
    %v442 = vunpack.c.h.b16 %v298
    %v443 = vunpack.c.l.b16 %v299
    %v444 = vunpack.c.h.b16 %v299
    %v445 = vunpack.c.l.b16 %v300
    %v446 = vunpack.c.h.b16 %v300
    %v447 = vunpack.c.l.b16 %v301
    %v448 = vunpack.c.h.b16 %v301
    %v449 = vunpack.c.l.b16 %v302
    %v450 = vunpack.c.h.b16 %v302
    %v451 = vunpack.c.l.b16 %v303
    %v452 = vunpack.c.h.b16 %v303
    %v453 = vunpack.c.l.b16 %v304
    %v454 = vunpack.c.h.b16 %v304
    %v455 = vunpack.c.l.b16 %v305
    %v456 = vunpack.c.h.b16 %v305
    %v457 = vunpack.c.l.b16 %v306
    %v458 = vunpack.c.h.b16 %v306
    %v459 = vunpack.c.l.b16 %v307
    %v460 = vunpack.c.h.b16 %v307
    %v461 = vunpack.c.l.b16 %v308
    %v462 = vunpack.c.h.b16 %v308
    %v463 = vunpack.c.l.b16 %v309
    %v464 = vunpack.c.h.b16 %v309
    %v465 = vunpack.c.l.b16 %v310
    %v466 = vunpack.c.h.b16 %v310
    %v467 = vunpack.c.l.b16 %v311
    %v468 = vunpack.c.h.b16 %v311
    %v469 = vunpack.c.l.b16 %v312
    %v470 = vunpack.c.h.b16 %v312
    %v471 = vunpack.c.l.b16 %v313
    %v472 = vunpack.c.h.b16 %v313
    %v473 = vunpack.c.l.b16 %v314
    %v474 = vunpack.c.h.b16 %v314
    %v475 = vunpack.c.l.b16 %v315
    %v476 = vunpack.c.h.b16 %v315
    %v477 = vunpack.c.l.b16 %v316
    %v478 = vunpack.c.h.b16 %v316
    %v479 = vunpack.c.l.b16 %v317
    %v480 = vunpack.c.h.b16 %v317
    %v481 = vunpack.c.l.b16 %v318
    %v482 = vunpack.c.h.b16 %v318
    %v483 = vunpack.c.l.b16 %v319
    %v484 = vunpack.c.h.b16 %v319
    %v485 = vunpack.c.l.b16 %v320
    %v486 = vunpack.c.h.b16 %v320
    %v487 = vunpack.c.l.b16 %v321
    %v488 = vunpack.c.h.b16 %v321
    %v489 = vunpack.c.l.b16 %v322
    %v490 = vunpack.c.h.b16 %v322
    %v491 = vunpack.c.l.b16 %v323
    %v492 = vunpack.c.h.b16 %v323
    %v493 = vunpack.c.l.b16 %v324
    %v494 = vunpack.c.h.b16 %v324
    %v495 = vunpack.c.l.b16 %v325
    %v496 = vunpack.c.h.b16 %v325
    %v497 = vunpack.c.l.b16 %v326
    %v498 = vunpack.c.h.b16 %v326
    %v499 = vunpack.c.l.b16 %v327
    %v500 = vunpack.c.h.b16 %v327
    %v501 = vunpack.c.l.b16 %v328
    %v502 = vunpack.c.h.b16 %v328
    %v503 = vunpack.c.l.b16 %v329
    %v504 = vunpack.c.h.b16 %v329
    %v505 = vunpack.c.l.b16 %v330
    %v506 = vunpack.c.h.b16 %v330
    %v507 = vunpack.c.l.b16 %v331
    %v508 = vunpack.c.h.b16 %v331
    %v509 = vunpack.c.l.b16 %v332
    %v510 = vunpack.c.h.b16 %v332
    %v511 = vunpack.c.l.b16 %v333
    %v512 = vunpack.c.h.b16 %v333
    %v513 = vunpack.c.l.b16 %v334
    %v514 = vunpack.c.h.b16 %v334
    %v515 = vunpack.c.l.b16 %v335
    %v516 = vunpack.c.h.b16 %v335
    %v517 = vunpack.c.l.b16 %v336
    %v518 = vunpack.c.h.b16 %v336
    %v519 = vunpack.c.l.b16 %v337
    %v520 = vunpack.c.h.b16 %v337
    %v521 = vunpack.c.l.b16 %v338
    %v522 = vunpack.c.h.b16 %v338
    %v523 = vunpack.c.l.b16 %v339
    %v524 = vunpack.c.h.b16 %v339
    %v525 = vunpack.c.l.b16 %v340
    %v526 = vunpack.c.h.b16 %v340
    %v527 = vunpack.c.l.b16 %v341
    %v528 = vunpack.c.h.b16 %v341
    %v529 = vunpack.c.l.b16 %v342
    %v530 = vunpack.c.h.b16 %v342
    %v531 = vunpack.c.l.b16 %v343
    %v532 = vunpack.c.h.b16 %v343
    %v533 = vunpack.c.l.b16 %v344
    %v534 = vunpack.c.h.b16 %v344
    %v535 = vunpack.c.l.b16 %v345
    %v536 = vunpack.c.h.b16 %v345
    %v537 = vunpack.c.l.b16 %v346
    %v538 = vunpack.c.h.b16 %v346
    %v539 = vunpack.c.l.b16 %v347
    %v540 = vunpack.c.h.b16 %v347
    %v541 = vunpack.c.l.b16 %v348
    %v542 = vunpack.c.h.b16 %v348
    %v543 = vunpack.c.l.b16 %v349
    %v544 = vunpack.c.h.b16 %v349
    %v545 = vunpack.c.l.b16 %v350
    %v546 = vunpack.c.h.b16 %v350
    %v547 = vunpack.c.l.b16 %v351
    %v548 = vunpack.c.h.b16 %v351
    %v549 = vunpack.c.l.b16 %v352
    %v550 = vunpack.c.h.b16 %v352
    %v551 = vunpack.c.l.b16 %v353
    %v552 = vunpack.c.h.b16 %v353
    %v553 = vunpack.c.l.b16 %v354
    %v554 = vunpack.c.h.b16 %v354
    %v555 = vunpack.c.l.b16 %v355
    %v556 = vunpack.c.h.b16 %v355
    %v557 = vunpack.c.l.b16 %v356
    %v558 = vunpack.c.h.b16 %v356
    %v559 = vunpack.c.l.b16 %v357
    %v560 = vunpack.c.h.b16 %v357
    %v561 = vunpack.c.l.b16 %v358
    %v562 = vunpack.c.h.b16 %v358
    %v563 = vpack.c.b16 %v437, %v435
    %v564 = vpack.c.b16 %v438, %v436
    %v565 = vpack.c.b16 %v441, %v439
    %v566 = vpack.c.b16 %v442, %v440
    %v567 = vpack.c.b16 %v445, %v443
    %v568 = vpack.c.b16 %v446, %v444
    %v569 = vpack.c.b16 %v449, %v447
    %v570 = vpack.c.b16 %v450, %v448
    %v571 = vpack.c.b16 %v453, %v451
    %v572 = vpack.c.b16 %v454, %v452
    %v573 = vpack.c.b16 %v457, %v455
    %v574 = vpack.c.b16 %v458, %v456
    %v575 = vpack.c.b16 %v461, %v459
    %v576 = vpack.c.b16 %v462, %v460
    %v577 = vpack.c.b16 %v465, %v463
    %v578 = vpack.c.b16 %v466, %v464
    %v579 = vpack.c.b16 %v469, %v467
    %v580 = vpack.c.b16 %v470, %v468
    %v581 = vpack.c.b16 %v473, %v471
    %v582 = vpack.c.b16 %v474, %v472
    %v583 = vpack.c.b16 %v477, %v475
    %v584 = vpack.c.b16 %v478, %v476
    %v585 = vpack.c.b16 %v481, %v479
    %v586 = vpack.c.b16 %v482, %v480
    %v587 = vpack.c.b16 %v485, %v483
    %v588 = vpack.c.b16 %v486, %v484
    %v589 = vpack.c.b16 %v489, %v487
    %v590 = vpack.c.b16 %v490, %v488
    %v591 = vpack.c.b16 %v493, %v491
    %v592 = vpack.c.b16 %v494, %v492
    %v593 = vpack.c.b16 %v497, %v495
    %v594 = vpack.c.b16 %v498, %v496
    %v595 = vpack.c.b16 %v501, %v499
    %v596 = vpack.c.b16 %v502, %v500
    %v597 = vpack.c.b16 %v505, %v503
    %v598 = vpack.c.b16 %v506, %v504
    %v599 = vpack.c.b16 %v509, %v507
    %v600 = vpack.c.b16 %v510, %v508
    %v601 = vpack.c.b16 %v513, %v511
    %v602 = vpack.c.b16 %v514, %v512
    %v603 = vpack.c.b16 %v517, %v515
    %v604 = vpack.c.b16 %v518, %v516
    %v605 = vpack.c.b16 %v521, %v519
    %v606 = vpack.c.b16 %v522, %v520
    %v607 = vpack.c.b16 %v525, %v523
    %v608 = vpack.c.b16 %v526, %v524
    %v609 = vpack.c.b16 %v529, %v527
    %v610 = vpack.c.b16 %v530, %v528
    %v611 = vpack.c.b16 %v533, %v531
    %v612 = vpack.c.b16 %v534, %v532
    %v613 = vpack.c.b16 %v537, %v535
    %v614 = vpack.c.b16 %v538, %v536
    %v615 = vpack.c.b16 %v541, %v539
    %v616 = vpack.c.b16 %v542, %v540
    %v617 = vpack.c.b16 %v545, %v543
    %v618 = vpack.c.b16 %v546, %v544
    %v619 = vpack.c.b16 %v549, %v547
    %v620 = vpack.c.b16 %v550, %v548
    %v621 = vpack.c.b16 %v553, %v551
    %v622 = vpack.c.b16 %v554, %v552
    %v623 = vpack.c.b16 %v557, %v555
    %v624 = vpack.c.b16 %v558, %v556
    %v625 = vpack.c.b16 %v561, %v559
    %v626 = vpack.c.b16 %v562, %v560
    %691 = vmatprep.subr.bf16.mxu0 %v564
    %692 = vmatpush1.bf16.msra.mxu0 %v563
    %693 = vmatprep.subr.bf16.mxu0 %v566
    %694 = vmatpush1.bf16.msra.mxu0 %v565
    %695 = vmatprep.subr.bf16.mxu0 %v568
    %696 = vmatpush1.bf16.msra.mxu0 %v567
    %697 = vmatprep.subr.bf16.mxu0 %v570
    %698 = vmatpush1.bf16.msra.mxu0 %v569
    %699 = vmatprep.subr.bf16.mxu0 %v572
    %700 = vmatpush1.bf16.msra.mxu0 %v571
    %701 = vmatprep.subr.bf16.mxu0 %v574
    %702 = vmatpush1.bf16.msra.mxu0 %v573
    %703 = vmatprep.subr.bf16.mxu0 %v576
    %704 = vmatpush1.bf16.msra.mxu0 %v575
    %705 = vmatprep.subr.bf16.mxu0 %v578
    %706 = vmatpush1.bf16.msra.mxu0 %v577
    %707 = vmatprep.subr.bf16.mxu0 %v580
    %708 = vmatpush1.bf16.msra.mxu0 %v579
    %709 = vmatprep.subr.bf16.mxu0 %v582
    %710 = vmatpush1.bf16.msra.mxu0 %v581
    %711 = vmatprep.subr.bf16.mxu0 %v584
    %712 = vmatpush1.bf16.msra.mxu0 %v583
    %713 = vmatprep.subr.bf16.mxu0 %v586
    %714 = vmatpush1.bf16.msra.mxu0 %v585
    %715 = vmatprep.subr.bf16.mxu0 %v588
    %716 = vmatpush1.bf16.msra.mxu0 %v587
    %717 = vmatprep.subr.bf16.mxu0 %v590
    %718 = vmatpush1.bf16.msra.mxu0 %v589
    %719 = vmatprep.subr.bf16.mxu0 %v592
    %720 = vmatpush1.bf16.msra.mxu0 %v591
    %721 = vmatprep.subr.bf16.mxu0 %v594
    %722 = vmatpush1.bf16.msra.mxu0 %v593
    %723 = vmatprep.mubr.bf16.mxu0 %v292
    %724 = vmatmul.mubr.bf16.gmra.mrb[0].mxu0 %v291
    %v725 = vpop.f32.mrb[0].mxu0
    %v726 = vadd.f32 %v364, %v725
    %v727 = vpop.f32.mrb[0].mxu0
    %v728 = vadd.f32 %v368, %v727
    %v729 = vpop.f32.mrb[0].mxu0
    %v730 = vpop.f32.mrb[0].mxu0
    %731 = vdwg.mxu0
    %732 = vmatprep.subr.bf16.mxu0 %v596
    %733 = vmatpush1.bf16.msra.mxu0 %v595
    %734 = vmatprep.subr.bf16.mxu0 %v598
    %735 = vmatpush1.bf16.msra.mxu0 %v597
    %736 = vmatprep.subr.bf16.mxu0 %v600
    %737 = vmatpush1.bf16.msra.mxu0 %v599
    %738 = vmatprep.subr.bf16.mxu0 %v602
    %739 = vmatpush1.bf16.msra.mxu0 %v601
    %740 = vmatprep.subr.bf16.mxu0 %v604
    %741 = vmatpush1.bf16.msra.mxu0 %v603
    %742 = vmatprep.subr.bf16.mxu0 %v606
    %743 = vmatpush1.bf16.msra.mxu0 %v605
    %744 = vmatprep.subr.bf16.mxu0 %v608
    %745 = vmatpush1.bf16.msra.mxu0 %v607
    %746 = vmatprep.subr.bf16.mxu0 %v610
    %747 = vmatpush1.bf16.msra.mxu0 %v609
    %748 = vmatprep.subr.bf16.mxu0 %v612
    %749 = vmatpush1.bf16.msra.mxu0 %v611
    %750 = vmatprep.subr.bf16.mxu0 %v614
    %751 = vmatpush1.bf16.msra.mxu0 %v613
    %752 = vmatprep.subr.bf16.mxu0 %v616
    %753 = vmatpush1.bf16.msra.mxu0 %v615
    %754 = vmatprep.subr.bf16.mxu0 %v618
    %755 = vmatpush1.bf16.msra.mxu0 %v617
    %756 = vmatprep.subr.bf16.mxu0 %v620
    %757 = vmatpush1.bf16.msra.mxu0 %v619
    %758 = vmatprep.subr.bf16.mxu0 %v622
    %759 = vmatpush1.bf16.msra.mxu0 %v621
    %760 = vmatprep.subr.bf16.mxu0 %v624
    %761 = vmatpush1.bf16.msra.mxu0 %v623
    %762 = vmatprep.subr.bf16.mxu0 %v626
    %763 = vmatpush1.bf16.msra.mxu0 %v625
    %764 = vmatprep.mubr.bf16.mxu0 %v294
    %765 = vmatmul.mubr.bf16.gmra.mrb[0].mxu0 %v293
    %v766 = vpop.f32.mrb[0].mxu0
    %v767 = vadd.f32 %v726, %v766
    %v768 = vpop.f32.mrb[0].mxu0
    %v769 = vadd.f32 %v728, %v768
    %v770 = vpop.f32.mrb[0].mxu0
    %v771 = vpop.f32.mrb[0].mxu0
    %772 = vdwg.mxu0
    %v773 = vmax.f32 %v767, 0.0
    %v774 = vmax.f32 %v769, 0.0
    %v775 = vpack.c.bf16 %v773, %v773
    %v776 = vpack.c.bf16 %v774, %v774
    %v777 = vld [vmem:[#allocation7] sm:$0xf]
    %v778 = vld [vmem:[#allocation7 + $0x4] sm:$0xf]
    %v779 = vld [vmem:[#allocation7 + $0x8] sm:$0xf]
    %v780 = vld [vmem:[#allocation7 + $0xc] sm:$0xf]
    %v781 = vld [vmem:[#allocation7 + $0x10] sm:$0xf]
    %v782 = vld [vmem:[#allocation7 + $0x14] sm:$0xf]
    %v783 = vld [vmem:[#allocation7 + $0x18] sm:$0xf]
    %v784 = vld [vmem:[#allocation7 + $0x1c] sm:$0xf]
    %v785 = vld [vmem:[#allocation7 + $0x20] sm:$0xf]
    %v786 = vld [vmem:[#allocation7 + $0x24] sm:$0xf]
    %v787 = vld [vmem:[#allocation7 + $0x28] sm:$0xf]
    %v788 = vld [vmem:[#allocation7 + $0x2c] sm:$0xf]
    %v789 = vld [vmem:[#allocation7 + $0x30] sm:$0xf]
    %v790 = vld [vmem:[#allocation7 + $0x34] sm:$0xf]
    %v791 = vld [vmem:[#allocation7 + $0x38] sm:$0xf]
    %v792 = vld [vmem:[#allocation7 + $0x3c] sm:$0xf]
    %v793 = vld [vmem:[#allocation7 + $0x40] sm:$0xf]
    %v794 = vld [vmem:[#allocation7 + $0x44] sm:$0xf]
    %v795 = vld [vmem:[#allocation7 + $0x48] sm:$0xf]
    %v796 = vld [vmem:[#allocation7 + $0x4c] sm:$0xf]
    %v797 = vld [vmem:[#allocation7 + $0x50] sm:$0xf]
    %v798 = vld [vmem:[#allocation7 + $0x54] sm:$0xf]
    %v799 = vld [vmem:[#allocation7 + $0x58] sm:$0xf]
    %v800 = vld [vmem:[#allocation7 + $0x5c] sm:$0xf]
    %v801 = vld [vmem:[#allocation7 + $0x60] sm:$0xf]
    %v802 = vld [vmem:[#allocation7 + $0x64] sm:$0xf]
    %v803 = vld [vmem:[#allocation7 + $0x68] sm:$0xf]
    %v804 = vld [vmem:[#allocation7 + $0x6c] sm:$0xf]
    %v805 = vld [vmem:[#allocation7 + $0x70] sm:$0xf]
    %v806 = vld [vmem:[#allocation7 + $0x74] sm:$0xf]
    %v807 = vld [vmem:[#allocation7 + $0x78] sm:$0xf]
    %v808 = vld [vmem:[#allocation7 + $0x7c] sm:$0xf]
    %v809 = vld [vmem:[%s6] sm:$0x1]
    %v811 = vlaneseq
    %v812 = vshrl.u32 %v811, 7
    %v813 = vsub.s32 0, %v812
    %v814 = vrot.slane %v809, %v813
    %v848 = vunpack.c.l.b16 %v777
    %v849 = vunpack.c.l.b16 %v778
    %v850 = vunpack.c.l.b16 %v779
    %v851 = vunpack.c.l.b16 %v780
    %v852 = vunpack.c.l.b16 %v781
    %v853 = vunpack.c.l.b16 %v782
    %v854 = vunpack.c.l.b16 %v783
    %v855 = vunpack.c.l.b16 %v784
    %v856 = vunpack.c.l.b16 %v785
    %v857 = vunpack.c.l.b16 %v786
    %v858 = vunpack.c.l.b16 %v787
    %v859 = vunpack.c.l.b16 %v788
    %v860 = vunpack.c.l.b16 %v789
    %v861 = vunpack.c.l.b16 %v790
    %v862 = vunpack.c.l.b16 %v791
    %v863 = vunpack.c.l.b16 %v792
    %v864 = vunpack.c.l.b16 %v793
    %v865 = vunpack.c.l.b16 %v794
    %v866 = vunpack.c.l.b16 %v795
    %v867 = vunpack.c.l.b16 %v796
    %v868 = vunpack.c.l.b16 %v797
    %v869 = vunpack.c.l.b16 %v798
    %v870 = vunpack.c.l.b16 %v799
    %v871 = vunpack.c.l.b16 %v800
    %v872 = vunpack.c.l.b16 %v801
    %v873 = vunpack.c.l.b16 %v802
    %v874 = vunpack.c.l.b16 %v803
    %v875 = vunpack.c.l.b16 %v804
    %v876 = vunpack.c.l.b16 %v805
    %v877 = vunpack.c.l.b16 %v806
    %v878 = vunpack.c.l.b16 %v807
    %v879 = vunpack.c.l.b16 %v808
    %v880 = vpack.c.b16 %v849, %v848
    %v881 = vpack.c.b16 %v851, %v850
    %v882 = vpack.c.b16 %v853, %v852
    %v883 = vpack.c.b16 %v855, %v854
    %v884 = vpack.c.b16 %v857, %v856
    %v885 = vpack.c.b16 %v859, %v858
    %v886 = vpack.c.b16 %v861, %v860
    %v887 = vpack.c.b16 %v863, %v862
    %v888 = vpack.c.b16 %v865, %v864
    %v889 = vpack.c.b16 %v867, %v866
    %v890 = vpack.c.b16 %v869, %v868
    %v891 = vpack.c.b16 %v871, %v870
    %v892 = vpack.c.b16 %v873, %v872
    %v893 = vpack.c.b16 %v875, %v874
    %v894 = vpack.c.b16 %v877, %v876
    %v895 = vpack.c.b16 %v879, %v878
    %912 = vmatprep.subr.bf16.mxu0 0
    %913 = vmatpush1.bf16.msra.mxu0 %v880
    %914 = vmatprep.subr.bf16.mxu0 0
    %915 = vmatpush1.bf16.msra.mxu0 %v881
    %916 = vmatprep.subr.bf16.mxu0 0
    %917 = vmatpush1.bf16.msra.mxu0 %v882
    %918 = vmatprep.subr.bf16.mxu0 0
    %919 = vmatpush1.bf16.msra.mxu0 %v883
    %920 = vmatprep.subr.bf16.mxu0 0
    %921 = vmatpush1.bf16.msra.mxu0 %v884
    %922 = vmatprep.subr.bf16.mxu0 0
    %923 = vmatpush1.bf16.msra.mxu0 %v885
    %924 = vmatprep.subr.bf16.mxu0 0
    %925 = vmatpush1.bf16.msra.mxu0 %v886
    %926 = vmatprep.subr.bf16.mxu0 0
    %927 = vmatpush1.bf16.msra.mxu0 %v887
    %928 = vmatprep.subr.bf16.mxu0 0
    %929 = vmatpush1.bf16.msra.mxu0 %v888
    %930 = vmatprep.subr.bf16.mxu0 0
    %931 = vmatpush1.bf16.msra.mxu0 %v889
    %932 = vmatprep.subr.bf16.mxu0 0
    %933 = vmatpush1.bf16.msra.mxu0 %v890
    %934 = vmatprep.subr.bf16.mxu0 0
    %935 = vmatpush1.bf16.msra.mxu0 %v891
    %936 = vmatprep.subr.bf16.mxu0 0
    %937 = vmatpush1.bf16.msra.mxu0 %v892
    %938 = vmatprep.subr.bf16.mxu0 0
    %939 = vmatpush1.bf16.msra.mxu0 %v893
    %940 = vmatprep.subr.bf16.mxu0 0
    %941 = vmatpush1.bf16.msra.mxu0 %v894
    %942 = vmatprep.subr.bf16.mxu0 0
    %943 = vmatpush1.bf16.msra.mxu0 %v895
    %944 = vmatprep.mubr.bf16.mxu0 %v776
    %945 = vmatmul.mubr.bf16.gmra.mrb[0].mxu0 %v775
    %v946 = vpop.f32.mrb[0].mxu0
    %v947 = vadd.f32 %v814, %v946
    %v948 = vpop.f32.mrb[0].mxu0
    %v949 = vpop.f32.mrb[0].mxu0
    %v950 = vpop.f32.mrb[0].mxu0
    %951 = vdwg.mxu0
    %v952 = vmax.f32 %v947, 0.0
    %v953 = vpack.c.bf16 %v952, %v952
    %v954 = vld [vmem:[%s7] sm:$0xf]
    %v955 = vld [vmem:[%s7 + $0x4] sm:$0xf]
    %v956 = vld [vmem:[%s7 + $0x8] sm:$0xf]
    %v957 = vld [vmem:[%s7 + $0xc] sm:$0xf]
    %v958 = vld [vmem:[%s7 + $0x10] sm:$0xf]
    %v959 = vld [vmem:[%s7 + $0x14] sm:$0xf]
    %v960 = vld [vmem:[%s7 + $0x18] sm:$0xf]
    %v961 = vld [vmem:[%s7 + $0x1c] sm:$0xf]
    %v962 = vld [vmem:[%s7 + $0x20] sm:$0xf]
    %v963 = vld [vmem:[%s7 + $0x24] sm:$0xf]
    %v964 = vld [vmem:[%s7 + $0x28] sm:$0xf]
    %v965 = vld [vmem:[%s7 + $0x2c] sm:$0xf]
    %v966 = vld [vmem:[%s7 + $0x30] sm:$0xf]
    %v967 = vld [vmem:[%s7 + $0x34] sm:$0xf]
    %v968 = vld [vmem:[%s7 + $0x38] sm:$0xf]
    %v969 = vld [vmem:[%s7 + $0x3c] sm:$0xf]
    %v970 = vld [vmem:[%s8] sm:$0x1]
    %v972 = vlaneseq
    %v973 = vshrl.u32 %v972, 7
    %v974 = vsub.s32 0, %v973
    %v975 = vrot.slane %v970, %v974
    %v993 = vunpack.c.l.b16 %v954
    %v994 = vunpack.c.l.b16 %v955
    %v995 = vunpack.c.l.b16 %v956
    %v996 = vunpack.c.l.b16 %v957
    %v997 = vunpack.c.l.b16 %v958
    %v998 = vunpack.c.l.b16 %v959
    %v999 = vunpack.c.l.b16 %v960
    %v1000 = vunpack.c.l.b16 %v961
    %v1001 = vunpack.c.l.b16 %v962
    %v1002 = vunpack.c.l.b16 %v963
    %v1003 = vunpack.c.l.b16 %v964
    %v1004 = vunpack.c.l.b16 %v965
    %v1005 = vunpack.c.l.b16 %v966
    %v1006 = vunpack.c.l.b16 %v967
    %v1007 = vunpack.c.l.b16 %v968
    %v1008 = vunpack.c.l.b16 %v969
    %v1009 = vpack.c.b16 %v994, %v993
    %v1010 = vpack.c.b16 %v996, %v995
    %v1011 = vpack.c.b16 %v998, %v997
    %v1012 = vpack.c.b16 %v1000, %v999
    %v1013 = vpack.c.b16 %v1002, %v1001
    %v1014 = vpack.c.b16 %v1004, %v1003
    %v1015 = vpack.c.b16 %v1006, %v1005
    %v1016 = vpack.c.b16 %v1008, %v1007
    %1025 = vmatprep.subr.bf16.mxu0 0
    %1026 = vmatpush1.bf16.msra.mxu0 %v1009
    %1027 = vmatprep.subr.bf16.mxu0 0
    %1028 = vmatpush1.bf16.msra.mxu0 %v1010
    %1029 = vmatprep.subr.bf16.mxu0 0
    %1030 = vmatpush1.bf16.msra.mxu0 %v1011
    %1031 = vmatprep.subr.bf16.mxu0 0
    %1032 = vmatpush1.bf16.msra.mxu0 %v1012
    %1033 = vmatprep.subr.bf16.mxu0 0
    %1034 = vmatpush1.bf16.msra.mxu0 %v1013
    %1035 = vmatprep.subr.bf16.mxu0 0
    %1036 = vmatpush1.bf16.msra.mxu0 %v1014
    %1037 = vmatprep.subr.bf16.mxu0 0
    %1038 = vmatpush1.bf16.msra.mxu0 %v1015
    %1039 = vmatprep.subr.bf16.mxu0 0
    %1040 = vmatpush1.bf16.msra.mxu0 %v1016
    %1041 = vmatprep.subr.bf16.mxu0 0
    %1042 = vmatpush1.bf16.msra.mxu0 0
    %1043 = vmatprep.subr.bf16.mxu0 0
    %1044 = vmatpush1.bf16.msra.mxu0 0
    %1045 = vmatprep.subr.bf16.mxu0 0
    %1046 = vmatpush1.bf16.msra.mxu0 0
    %1047 = vmatprep.subr.bf16.mxu0 0
    %1048 = vmatpush1.bf16.msra.mxu0 0
    %1049 = vmatprep.subr.bf16.mxu0 0
    %1050 = vmatpush1.bf16.msra.mxu0 0
    %1051 = vmatprep.subr.bf16.mxu0 0
    %1052 = vmatpush1.bf16.msra.mxu0 0
    %1053 = vmatprep.subr.bf16.mxu0 0
    %1054 = vmatpush1.bf16.msra.mxu0 0
    %1055 = vmatprep.subr.bf16.mxu0 0
    %1056 = vmatpush1.bf16.msra.mxu0 0
    %1057 = vmatprep.mubr.bf16.mxu0 0
    %1058 = vmatmul.mubr.bf16.gmra.mrb[0].mxu0 %v953
    %v1059 = vpop.f32.mrb[0].mxu0
    %v1060 = vadd.f32 %v975, %v1059
    %v1061 = vpop.f32.mrb[0].mxu0
    %v1062 = vpop.f32.mrb[0].mxu0
    %v1063 = vpop.f32.mrb[0].mxu0
    %1064 = vdwg.mxu0
    %v1065 = vmax.f32 %v1060, 0.0
    %v1066 = vpack.c.bf16 %v1065, %v1065
    %v1067 = vld [vmem:[%s9] sm:$0xf]
    %v1068 = vld [vmem:[%s9 + $0x4] sm:$0xf]
    %v1069 = vld [vmem:[%s9 + $0x8] sm:$0xf]
    %v1070 = vld [vmem:[%s9 + $0xc] sm:$0xf]
    %v1071 = vld [vmem:[%s9 + $0x10] sm:$0xf]
    %v1072 = vld [vmem:[%s9 + $0x14] sm:$0xf]
    %v1073 = vld [vmem:[%s9 + $0x18] sm:$0xf]
    %v1074 = vld [vmem:[%s9 + $0x1c] sm:$0xf]
    %v1075 = vld [vmem:[%s9 + $0x20] sm:$0xf]
    %v1076 = vld [vmem:[%s9 + $0x24] sm:$0xf]
    %v1077 = vld [vmem:[%s9 + $0x28] sm:$0xf]
    %v1078 = vld [vmem:[%s9 + $0x2c] sm:$0xf]
    %v1079 = vld [vmem:[%s9 + $0x30] sm:$0xf]
    %v1080 = vld [vmem:[%s9 + $0x34] sm:$0xf]
    %v1081 = vld [vmem:[%s9 + $0x38] sm:$0xf]
    %v1082 = vld [vmem:[%s9 + $0x3c] sm:$0xf]
    %v1083 = vld [vmem:[%s10] sm:$0x1]
    %v1085 = vlaneseq
    %v1086 = vshrl.u32 %v1085, 7
    %v1087 = vsub.s32 0, %v1086
    %v1088 = vrot.slane %v1083, %v1087
    %v1106 = vunpack.c.l.b16 %v1067
    %v1107 = vunpack.c.l.b16 %v1068
    %v1108 = vunpack.c.l.b16 %v1069
    %v1109 = vunpack.c.l.b16 %v1070
    %v1110 = vunpack.c.l.b16 %v1071
    %v1111 = vunpack.c.l.b16 %v1072
    %v1112 = vunpack.c.l.b16 %v1073
    %v1113 = vunpack.c.l.b16 %v1074
    %v1114 = vunpack.c.l.b16 %v1075
    %v1115 = vunpack.c.l.b16 %v1076
    %v1116 = vunpack.c.l.b16 %v1077
    %v1117 = vunpack.c.l.b16 %v1078
    %v1118 = vunpack.c.l.b16 %v1079
    %v1119 = vunpack.c.l.b16 %v1080
    %v1120 = vunpack.c.l.b16 %v1081
    %v1121 = vunpack.c.l.b16 %v1082
    %v1122 = vpack.c.b16 %v1107, %v1106
    %v1123 = vpack.c.b16 %v1109, %v1108
    %v1124 = vpack.c.b16 %v1111, %v1110
    %v1125 = vpack.c.b16 %v1113, %v1112
    %v1126 = vpack.c.b16 %v1115, %v1114
    %v1127 = vpack.c.b16 %v1117, %v1116
    %v1128 = vpack.c.b16 %v1119, %v1118
    %v1129 = vpack.c.b16 %v1121, %v1120
    %1138 = vmatprep.subr.bf16.mxu0 0
    %1139 = vmatpush1.bf16.msra.mxu0 %v1122
    %1140 = vmatprep.subr.bf16.mxu0 0
    %1141 = vmatpush1.bf16.msra.mxu0 %v1123
    %1142 = vmatprep.subr.bf16.mxu0 0
    %1143 = vmatpush1.bf16.msra.mxu0 %v1124
    %1144 = vmatprep.subr.bf16.mxu0 0
    %1145 = vmatpush1.bf16.msra.mxu0 %v1125
    %1146 = vmatprep.subr.bf16.mxu0 0
    %1147 = vmatpush1.bf16.msra.mxu0 %v1126
    %1148 = vmatprep.subr.bf16.mxu0 0
    %1149 = vmatpush1.bf16.msra.mxu0 %v1127
    %1150 = vmatprep.subr.bf16.mxu0 0
    %1151 = vmatpush1.bf16.msra.mxu0 %v1128
    %1152 = vmatprep.subr.bf16.mxu0 0
    %1153 = vmatpush1.bf16.msra.mxu0 %v1129
    %1154 = vmatprep.subr.bf16.mxu0 0
    %1155 = vmatpush1.bf16.msra.mxu0 0
    %1156 = vmatprep.subr.bf16.mxu0 0
    %1157 = vmatpush1.bf16.msra.mxu0 0
    %1158 = vmatprep.subr.bf16.mxu0 0
    %1159 = vmatpush1.bf16.msra.mxu0 0
    %1160 = vmatprep.subr.bf16.mxu0 0
    %1161 = vmatpush1.bf16.msra.mxu0 0
    %1162 = vmatprep.subr.bf16.mxu0 0
    %1163 = vmatpush1.bf16.msra.mxu0 0
    %1164 = vmatprep.subr.bf16.mxu0 0
    %1165 = vmatpush1.bf16.msra.mxu0 0
    %1166 = vmatprep.subr.bf16.mxu0 0
    %1167 = vmatpush1.bf16.msra.mxu0 0
    %1168 = vmatprep.subr.bf16.mxu0 0
    %1169 = vmatpush1.bf16.msra.mxu0 0
    %1170 = vmatprep.mubr.bf16.mxu0 0
    %1171 = vmatmul.mubr.bf16.gmra.mrb[0].mxu0 %v1066
    %v1172 = vpop.f32.mrb[0].mxu0
    %v1173 = vadd.f32 %v1088, %v1172
    %v1174 = vpop.f32.mrb[0].mxu0
    %v1175 = vpop.f32.mrb[0].mxu0
    %v1176 = vpop.f32.mrb[0].mxu0
    %1177 = vdwg.mxu0
    %vm1178 = vcmask 130048
    %1179 = vst.msk [vmem:[#allocation8] sm:$0xff] %vm1178, %v1173
    // Predicated region
    $region58: #{tpu_custom_call.1} parent=1 // pred_check
      _
    $region59: #{tpu_custom_call.1} parent=1 // pred_check_branch
      %1181 = sbr.rel (0) target = $region61
    $region60: #{tpu_custom_call.1} parent=1 // pred_region
      %s1183 = ssub.s32 128, 128
      %1184 = vsyncadd [#allocation4], %s1183
      %s1186 = sshll.u32 [#allocation8], 4
      %s1187 = int_to_ptr.vmem [resolvable:$true] %s1186
      %1189 = dma.vmem_to_hbm [thread:$0]  %s1187, 128, %s11, [#allocation4]
    $region61: #{tpu_custom_call.1} parent=1 // pred_fallthru
      _
    // Predicated region
    $region62: #{tpu_custom_call.1} parent=1 // pred_check
      _
    $region63: #{tpu_custom_call.1} parent=1 // pred_check_branch
      %1191 = sbr.rel (0) target = $region65
    $region64: #{tpu_custom_call.1} parent=1 // pred_region
      %1192 = dma.done [#allocation4], 128
    $region65: #{tpu_custom_call.1} parent=1 // pred_fallthru
      _
    %1193 = vsyncpa [#allocation3], 1
    %1194 = vsyncpa [#allocation6], 1
    %1195 = vsyncpa [#allocation4], 1

</llo_original>
